<compile_context>
chip_gen: v7x
topology: tpu7x:2x2x1
jax: 0.10.0
libtpu: 0.0.40
codegen_flags: <defaults>
</compile_context>

<pallas_src>
import jax
import jax.numpy as jnp
from jax.experimental import pallas as pl
from jax.experimental.pallas import tpu as pltpu


# ------------------------- Pallas kernel -------------------------

def patch_embed_kernel(tok_ref, w_ref, add_ref, out_ref):
    # tok_ref : (BM, T, Kp)  token rows per batch (row 0 zero = cls slot)
    # w_ref   : (Kp, Ep)     padded projection weight (resident)
    # add_ref : (T, Ep)      pos + [cls ; bias] slab (resident)
    # out_ref : (BM, T, Ep)
    bm, t, kp = tok_ref.shape
    ep = w_ref.shape[1]

    # Collapse batch into the matmul: one (BM*T, Kp) x (Kp, Ep) MXU op.
    tok2d = tok_ref[...].reshape(bm * t, kp)
    proj = jnp.dot(tok2d, w_ref[...], preferred_element_type=jnp.float32)

    # Single full-tile, lane-dense store: projection + folded cls/bias/pos.
    out_ref[...] = proj.reshape(bm, t, ep) + add_ref[...][None, :, :]


# ------------------------- wrapper -------------------------

def patch_embedding_pallas(x, conv_w, conv_b, cls_token, position,
                           patch_size_w=2, patch_size_h=40,
                           compute_dtype=jnp.float32, block_b=256):
    """Mirrors PatchEmbedding.forward.

    x: any shape with size % 640 == 0 (viewed as (-1, 1, 10, 64)).
    compute_dtype: jnp.float32 (default) or jnp.bfloat16 on v6e/v7x for halved
    input DMA bytes (accumulation stays f32 via preferred_element_type).
    """
    assert x.size % 640 == 0, "x must reshape to (-1, 1, 10, 64)"
    x4 = x.reshape(-1, 1, 10, 64)                    # NCHW, matches x.view(...)
    B, C, H, W = x4.shape
    # NOTE: module naming — kernel_size=(patch_size_w, patch_size_h), i.e.
    # patch_size_w is the kernel HEIGHT and patch_size_h the kernel WIDTH.
    kh, kw = patch_size_w, patch_size_h
    n_h, n_w = H // kh, W // kw                      # VALID conv drops remainder
    N = n_h * n_w
    T = N + 1                                        # +1 cls token
    E = conv_w.shape[0]
    K = C * kh * kw

    # --- im2col patch extraction (order (c, kh, kw) matches conv weight flatten) ---
    if C == 1 and n_w == 1:
        # Pure slice + reshape: bit-identical to the transpose path, no copy.
        patches = x4[:, 0, : n_h * kh, : kw].reshape(B, N, K)
    else:
        xc = x4[:, :, : n_h * kh, : n_w * kw]
        p = xc.reshape(B, C, n_h, kh, n_w, kw).transpose(0, 2, 4, 1, 3, 5)
        patches = p.reshape(B, N, K)
    patches = patches.astype(compute_dtype)

    # --- pad K and E to lane-dense multiples of 128 ---
    Kp = ((K + 127) // 128) * 128
    Ep = ((E + 127) // 128) * 128

    # tokens: per batch, row 0 = zeros (cls slot), rows 1..N = patches (K-padded).
    tokens = jnp.zeros((B, T, Kp), compute_dtype).at[:, 1:, :K].set(patches)

    # conv weight (E, C, kh, kw) -> (K, E), zero-padded to (Kp, Ep).
    w2d = conv_w.reshape(E, K).T.astype(compute_dtype)
    w_pad = jnp.zeros((Kp, Ep), compute_dtype).at[:K, :E].set(w2d)

    # Fold cls token, conv bias and positional embedding into one slab (T, Ep):
    #   row 0      = cls + pos[0]
    #   rows 1..N  = bias + pos[1:]
    bias = conv_b.reshape(1, E).astype(jnp.float32)
    cls = cls_token.reshape(1, E).astype(jnp.float32)
    pos = position.astype(jnp.float32)               # (T, E)
    add = pos + jnp.concatenate([cls, jnp.broadcast_to(bias, (N, E))], axis=0)
    add_pad = jnp.zeros((T, Ep), jnp.float32).at[:, :E].set(add)

    # --- batch grid: BM batches per step, "parallel" axis (megacore / v7x 2-TC) ---
    BM = max(1, min(block_b, B))
    Bp = ((B + BM - 1) // BM) * BM
    if Bp != B:
        tokens = jnp.concatenate(
            [tokens, jnp.zeros((Bp - B, T, Kp), compute_dtype)], axis=0)
    grid = (Bp // BM,)

    in_itemsize = jnp.dtype(compute_dtype).itemsize
    cost = pl.CostEstimate(
        flops=2 * Bp * T * Kp * Ep,
        transcendentals=0,
        bytes_accessed=(Bp * T * Kp * in_itemsize          # tokens
                        + Kp * Ep * in_itemsize            # weight
                        + T * Ep * 4                       # add slab
                        + Bp * T * Ep * 4),                # output
    )

    out = pl.pallas_call(
        patch_embed_kernel,
        out_shape=jax.ShapeDtypeStruct((Bp, T, Ep), jnp.float32),
        grid_spec=pltpu.PrefetchScalarGridSpec(
            num_scalar_prefetch=0,
            grid=grid,
            in_specs=[
                pl.BlockSpec((BM, T, Kp), lambda i: (i, 0, 0)),   # tokens: tiled on B
                pl.BlockSpec((Kp, Ep), lambda i: (0, 0)),          # weight: resident
                pl.BlockSpec((T, Ep), lambda i: (0, 0)),           # add:    resident
            ],
            out_specs=pl.BlockSpec((BM, T, Ep), lambda i: (i, 0, 0)),
        ),
        compiler_params=pltpu.CompilerParams(
            dimension_semantics=("parallel",),
            vmem_limit_bytes=48 * 1024 * 1024,   # safe on v7x (64 MiB) and v5e/v6e
        ),
        cost_estimate=cost,
    )(tokens, w_pad, add_pad)

    # Slice away batch padding and E padding.
    return out[:B, :, :E]


# ------------------------- pure-JAX reference -------------------------

def patch_embedding_ref(x, conv_w, conv_b, cls_token, position):
    x4 = x.reshape(-1, 1, 10, 64)
    B = x4.shape[0]
    y = jax.lax.conv_general_dilated(
        x4, conv_w, window_strides=(2, 40), padding="VALID",
        dimension_numbers=("NCHW", "OIHW", "NCHW"),
    )                                                   # (B, E, 5, 1)
    y = y + conv_b[None, :, None, None]
    Bn, E, h, w = y.shape
    y = y.transpose(0, 2, 3, 1).reshape(Bn, h * w, E)   # b e h w -> b (h w) e
    cls = jnp.broadcast_to(cls_token, (B, 1, E))
    y = jnp.concatenate([cls, y], axis=1)
    return y + position[None, :, :]


# ------------------------- main -------------------------

if __name__ == "__main__":
    # Hyperparameters implied by forward(): input viewed as (B, 1, 10, 64),
    # kernel/stride (2, 40), emb_size = 80 -> 5 patches -> 6 tokens.
    in_channels, kh, kw, emb_size = 1, 2, 40, 80
    n_tokens = 6
    B = 2

    key = jax.random.PRNGKey(0)
    k_x, k_w, k_b, k_cls, k_pos = jax.random.split(key, 5)

    x = jax.random.normal(k_x, (B, 640), dtype=jnp.float32)          # views to (B,1,10,64)
    conv_w = jax.random.normal(k_w, (emb_size, in_channels, kh, kw), jnp.float32) * 0.05
    conv_b = jax.random.normal(k_b, (emb_size,), jnp.float32) * 0.05
    cls_token = jax.random.normal(k_cls, (1, 1, emb_size), jnp.float32)
    position = jax.random.normal(k_pos, (n_tokens, emb_size), jnp.float32)

    out = patch_embedding_pallas(x, conv_w, conv_b, cls_token, position,
                                 patch_size_w=kh, patch_size_h=kw)
    out = jax.block_until_ready(out)

    ref = patch_embedding_ref(x, conv_w, conv_b, cls_token, position)
    assert out.shape == (B, n_tokens, emb_size), out.shape
    err = float(jnp.max(jnp.abs(out - ref)))
    assert jnp.allclose(out, ref, atol=1e-4, rtol=1e-4), err

    # TODO(synk): pass compute_dtype=jnp.bfloat16 on v6e/v7x when this op is
    # embedded in a bf16 model (accumulation stays f32 inside the kernel).

    print("KERNEL_OK")
</pallas_src>

<mosaic_0001>
module attributes {stable_mosaic.version = 11 : i64} {
  func.func @patch_embed_kernel(%arg0: i32, %arg1: memref<2x6x128xf32, #tpu.memory_space<vmem>>, %arg2: memref<128x128xf32, #tpu.memory_space<vmem>>, %arg3: memref<6x128xf32, #tpu.memory_space<vmem>>, %arg4: memref<2x6x128xf32, #tpu.memory_space<vmem>>) attributes {dimension_semantics = [#tpu.dimension_semantics<parallel>], iteration_bounds = array<i64: 1>, scalar_prefetch = 0 : i64, scratch_operands = 0 : i64, tpu.core_type = #tpu.core_type<tc>, window_params = [{transform_indices = @transform_0, window_bounds = array<i64: 2, 6, 128>}, {pipeline_mode = #tpu.pipeline_mode<synchronous>, transform_indices = @transform_1, window_bounds = array<i64: 128, 128>}, {pipeline_mode = #tpu.pipeline_mode<synchronous>, transform_indices = @transform_2, window_bounds = array<i64: 6, 128>}, {transform_indices = @transform_3, window_bounds = array<i64: 2, 6, 128>}]} {
    %c0 = arith.constant 0 : index
    %c0_0 = arith.constant 0 : index
    %c0_1 = arith.constant 0 : index
    %0 = vector.load %arg1[%c0, %c0_0, %c0_1] : memref<2x6x128xf32, #tpu.memory_space<vmem>>, vector<2x6x128xf32>
    %1 = vector.shape_cast %0 : vector<2x6x128xf32> to vector<12x128xf32>
    %c0_2 = arith.constant 0 : index
    %c0_3 = arith.constant 0 : index
    %2 = vector.load %arg2[%c0_2, %c0_3] : memref<128x128xf32, #tpu.memory_space<vmem>>, vector<128x128xf32>
    %cst = arith.constant dense<0.000000e+00> : vector<12x128xf32>
    %3 = tpu.matmul %1, %2, %cst {dimension_numbers = #tpu.dot_dimension_numbers<[1], [0], [0], [1], [0, 0, 1, 1], [], []>} : vector<12x128xf32>, vector<128x128xf32>, vector<12x128xf32> -> vector<12x128xf32>
    %4 = vector.shape_cast %3 : vector<12x128xf32> to vector<2x6x128xf32>
    %c0_4 = arith.constant 0 : index
    %c0_5 = arith.constant 0 : index
    %5 = vector.load %arg3[%c0_4, %c0_5] : memref<6x128xf32, #tpu.memory_space<vmem>>, vector<6x128xf32>
    %6 = vector.shape_cast %5 : vector<6x128xf32> to vector<1x6x128xf32>
    %7 = vector.broadcast %6 : vector<1x6x128xf32> to vector<2x6x128xf32>
    %8 = arith.addf %4, %7 : vector<2x6x128xf32>
    %c0_6 = arith.constant 0 : index
    %c0_7 = arith.constant 0 : index
    %c0_8 = arith.constant 0 : index
    %9 = vector.load %arg4[%c0_6, %c0_7, %c0_8] : memref<2x6x128xf32, #tpu.memory_space<vmem>>, vector<2x6x128xf32>
    tpu.vector_store %arg4[%c0_6, %c0_7, %c0_8], %8 {strides = array<i32>} : memref<2x6x128xf32, #tpu.memory_space<vmem>>, vector<2x6x128xf32>,
    return
  }
  func.func @transform_0(%arg0: i32) -> (i32, i32, i32) {
    %c0_i32 = arith.constant 0 : i32
    %c0_i32_0 = arith.constant 0 : i32
    %c0_i32_1 = arith.constant 0 : i32
    return %arg0, %c0_i32, %c0_i32_0 : i32, i32, i32
  }
  func.func @transform_1(%arg0: i32) -> (i32, i32) {
    %c0_i32 = arith.constant 0 : i32
    %c0_i32_0 = arith.constant 0 : i32
    %c0_i32_1 = arith.constant 0 : i32
    return %c0_i32, %c0_i32_0 : i32, i32
  }
  func.func @transform_2(%arg0: i32) -> (i32, i32) {
    %c0_i32 = arith.constant 0 : i32
    %c0_i32_0 = arith.constant 0 : i32
    %c0_i32_1 = arith.constant 0 : i32
    return %c0_i32, %c0_i32_0 : i32, i32
  }
  func.func @transform_3(%arg0: i32) -> (i32, i32, i32) {
    %c0_i32 = arith.constant 0 : i32
    %c0_i32_0 = arith.constant 0 : i32
    %c0_i32_1 = arith.constant 0 : i32
    return %arg0, %c0_i32, %c0_i32_0 : i32, i32, i32
  }
}

</mosaic_0001>

<llo_original>
// kernel: tpu_custom_call.1
$region0: #{tpu_custom_call.1}
  #allocation0 [shape = 'u32[]', space=smem, size = 0x4, offset = 0x4, fixed_abs, tag = 'smem constant byte address 0x4 - core index']
  #allocation1 [shape = 'u32[144,128]{1,0:T(1,128)}', space=vmem, size = 0x12000, scoped, tag = 'internal scratch']
  %s0 = inlined_call_operand.vmem [shape: f32[2,6,128], index: 0, kind: input, shape index: {}]
  %s1 = inlined_call_operand.hbm [shape: f32[128,128], index: 1, kind: input, shape index: {}]
  %s2 = inlined_call_operand.vmem [shape: f32[6,128], index: 2, kind: input, shape index: {}]
  %s3 = inlined_call_operand.vmem [shape: f32[2,6,128], index: 3, kind: output, shape index: {}]
  %s4 = sld [smem:[#allocation0]]
  $region26: #{tpu_custom_call.1} parent=0
    _
  %s6 = ssub.s32 1, %s4
  %s7 = scalar_select 0, %s6, %s4
  $region1: #{tpu_custom_call.1} parent=0
    #allocation2 [shape = 'u8[65536]{0}', space=vmem, size = 0x10000, scoped, tag = 'input window, operand 1, single buffered']
    #allocation3 [shape = 's32[1]{0}', space=sflag, size = 0x4, scoped, tag = 'scoped memory for tpu_custom_call.1']
    %8 = vsyncpa [#allocation3], 0
    // Predicated region
    $region2: #{tpu_custom_call.1} parent=1 // pred_check
      _
    $region3: #{tpu_custom_call.1} parent=1 // pred_check_branch
      %10 = sbr.rel (0) target = $region5
    $region4: #{tpu_custom_call.1} parent=1 // pred_region
      _
    $region5: #{tpu_custom_call.1} parent=1 // pred_fallthru
      _
    // Predicated region
    $region6: #{tpu_custom_call.1} parent=1 // pred_check
      _
    $region7: #{tpu_custom_call.1} parent=1 // pred_check_branch
      %12 = sbr.rel (0) target = $region9
    $region8: #{tpu_custom_call.1} parent=1 // pred_region
      %s14 = ssub.s32 2048, 2048
      %15 = vsyncadd [#allocation3], %s14
      %s16 = sshll.u32 [#allocation2], 4
      %s17 = int_to_ptr.vmem [resolvable:$true] %s16
      %22 = dma.hbm_to_vmem [thread:$0]  %s1, 2048, %s17, [#allocation3], 128, 128, 8
    $region9: #{tpu_custom_call.1} parent=1 // pred_fallthru
      _
    // Predicated region
    $region10: #{tpu_custom_call.1} parent=1 // pred_check
      _
    $region11: #{tpu_custom_call.1} parent=1 // pred_check_branch
      %24 = sbr.rel (0) target = $region13
    $region12: #{tpu_custom_call.1} parent=1 // pred_region
      _
    $region13: #{tpu_custom_call.1} parent=1 // pred_fallthru
      _
    // Predicated region
    $region14: #{tpu_custom_call.1} parent=1 // pred_check
      _
    $region15: #{tpu_custom_call.1} parent=1 // pred_check_branch
      %26 = sbr.rel (0) target = $region17
    $region16: #{tpu_custom_call.1} parent=1 // pred_region
      %27 = dma.done [#allocation3], 2048
    $region17: #{tpu_custom_call.1} parent=1 // pred_fallthru
      _
    %v28 = vld [vmem:[%s0] sm:$0x3f]
    %v29 = vld [vmem:[%s0 + $0x8] sm:$0x3f]
    %v32 = vcombine.high %v28, %v28
    %v34 = vunpack.c.l.s4 1983009808
    %v35 = vunpack.c.0.s8 %v34
    %v36 = vlaneseq
    %v37 = vshrl.u32 %v36, 7
    %v38 = vsub.s32 %v35, %v37
    %v39 = vrot.slane %v28, %v38
    %v41 = vunpack.c.l.s4 1983009808
    %v42 = vunpack.c.0.s8 %v41
    %v43 = vlaneseq
    %v44 = vshrl.u32 %v43, 7
    %v45 = vsub.s32 %v42, %v44
    %v46 = vrot.slane %v32, %v45
    %v47 = vcombine.high %v39, %v39
    %v48 = vcombine.high %v29, %v29
    %v50 = vunpack.c.l.s4 1983009808
    %v51 = vunpack.c.0.s8 %v50
    %v52 = vlaneseq
    %v53 = vshrl.u32 %v52, 7
    %v54 = vsub.s32 %v51, %v53
    %v55 = vrot.slane %v29, %v54
    %v57 = vunpack.c.l.s4 1983009808
    %v58 = vunpack.c.0.s8 %v57
    %v59 = vlaneseq
    %v60 = vshrl.u32 %v59, 7
    %v61 = vsub.s32 %v58, %v60
    %v62 = vrot.slane %v48, %v61
    %v63 = vcombine.high %v55, %v55
    %v64 = vld [vmem:[#allocation2] sm:$0xff]
    %v65 = vld [vmem:[#allocation2 + $0x8] sm:$0xff]
    %v66 = vld [vmem:[#allocation2 + $0x10] sm:$0xff]
    %v67 = vld [vmem:[#allocation2 + $0x18] sm:$0xff]
    %v68 = vld [vmem:[#allocation2 + $0x20] sm:$0xff]
    %v69 = vld [vmem:[#allocation2 + $0x28] sm:$0xff]
    %v70 = vld [vmem:[#allocation2 + $0x30] sm:$0xff]
    %v71 = vld [vmem:[#allocation2 + $0x38] sm:$0xff]
    %v72 = vld [vmem:[#allocation2 + $0x40] sm:$0xff]
    %v73 = vld [vmem:[#allocation2 + $0x48] sm:$0xff]
    %v74 = vld [vmem:[#allocation2 + $0x50] sm:$0xff]
    %v75 = vld [vmem:[#allocation2 + $0x58] sm:$0xff]
    %v76 = vld [vmem:[#allocation2 + $0x60] sm:$0xff]
    %v77 = vld [vmem:[#allocation2 + $0x68] sm:$0xff]
    %v78 = vld [vmem:[#allocation2 + $0x70] sm:$0xff]
    %v79 = vld [vmem:[#allocation2 + $0x78] sm:$0xff]
    %v80 = vcombine.low %v39, %v47
    %v81 = vcombine.low %v46, %v55
    %v83 = vunpack.c.l.s4 1983009808
    %v84 = vunpack.c.0.s8 %v83
    %v85 = vlaneseq
    %v86 = vshrl.u32 %v85, 7
    %v87 = vsub.s32 %v84, %v86
    %v88 = vrot.slane %v80, %v87
    %v90 = vunpack.c.l.s4 1983009808
    %v91 = vunpack.c.0.s8 %v90
    %v92 = vlaneseq
    %v93 = vshrl.u32 %v92, 7
    %v94 = vsub.s32 %v91, %v93
    %v95 = vrot.slane %v81, %v94
    %v96 = vcombine.low %v88, %v95
    %v97 = vcombine.low %v63, %v62
    %v99 = vunpack.c.l.s4 1983009808
    %v100 = vunpack.c.0.s8 %v99
    %v101 = vlaneseq
    %v102 = vshrl.u32 %v101, 7
    %v103 = vsub.s32 %v100, %v102
    %v104 = vrot.slane %v97, %v103
    %107 = vmatprep.subr.mxu0 0.0
    %108 = vmatpush1.msra.mxu0 %v64
    %109 = vmatprep.subr.mxu0 0.0
    %110 = vmatpush1.msra.mxu0 %v65
    %111 = vmatprep.subr.mxu0 0.0
    %112 = vmatpush1.msra.mxu0 %v66
    %113 = vmatprep.subr.mxu0 0.0
    %114 = vmatpush1.msra.mxu0 %v67
    %115 = vmatprep.subr.mxu0 0.0
    %116 = vmatpush1.msra.mxu0 %v68
    %117 = vmatprep.subr.mxu0 0.0
    %118 = vmatpush1.msra.mxu0 %v69
    %119 = vmatprep.subr.mxu0 0.0
    %120 = vmatpush1.msra.mxu0 %v70
    %121 = vmatprep.subr.mxu0 0.0
    %122 = vmatpush1.msra.mxu0 %v71
    %123 = vmatprep.subr.mxu0 0.0
    %124 = vmatpush1.msra.mxu0 %v72
    %125 = vmatprep.subr.mxu0 0.0
    %126 = vmatpush1.msra.mxu0 %v73
    %127 = vmatprep.subr.mxu0 0.0
    %128 = vmatpush1.msra.mxu0 %v74
    %129 = vmatprep.subr.mxu0 0.0
    %130 = vmatpush1.msra.mxu0 %v75
    %131 = vmatprep.subr.mxu0 0.0
    %132 = vmatpush1.msra.mxu0 %v76
    %133 = vmatprep.subr.mxu0 0.0
    %134 = vmatpush1.msra.mxu0 %v77
    %135 = vmatprep.subr.mxu0 0.0
    %136 = vmatpush1.msra.mxu0 %v78
    %137 = vmatprep.subr.mxu0 0.0
    %138 = vmatpush1.msra.mxu0 %v79
    %139 = vmatprep.subr.mxu0 0.0
    %140 = vmatpush1.msra.mxu0 0.0
    %141 = vmatprep.subr.mxu0 0.0
    %142 = vmatpush1.msra.mxu0 0.0
    %143 = vmatprep.subr.mxu0 0.0
    %144 = vmatpush1.msra.mxu0 0.0
    %145 = vmatprep.subr.mxu0 0.0
    %146 = vmatpush1.msra.mxu0 0.0
    %147 = vmatprep.subr.mxu0 0.0
    %148 = vmatpush1.msra.mxu0 0.0
    %149 = vmatprep.subr.mxu0 0.0
    %150 = vmatpush1.msra.mxu0 0.0
    %151 = vmatprep.subr.mxu0 0.0
    %152 = vmatpush1.msra.mxu0 0.0
    %153 = vmatprep.subr.mxu0 0.0
    %154 = vmatpush1.msra.mxu0 0.0
    %155 = vmatprep.subr.mxu0 0.0
    %156 = vmatpush1.msra.mxu0 0.0
    %157 = vmatprep.subr.mxu0 0.0
    %158 = vmatpush1.msra.mxu0 0.0
    %159 = vmatprep.subr.mxu0 0.0
    %160 = vmatpush1.msra.mxu0 0.0
    %161 = vmatprep.subr.mxu0 0.0
    %162 = vmatpush1.msra.mxu0 0.0
    %163 = vmatprep.subr.mxu0 0.0
    %164 = vmatpush1.msra.mxu0 0.0
    %165 = vmatprep.subr.mxu0 0.0
    %166 = vmatpush1.msra.mxu0 0.0
    %167 = vmatprep.subr.mxu0 0.0
    %168 = vmatpush1.msra.mxu0 0.0
    %169 = vmatprep.subr.mxu0 0.0
    %170 = vmatpush1.msra.mxu0 0.0
    %171 = vmatprep.mubr.f32.mxu0 0.0
    %172 = vmatmul.mubr.f32.gmra.mrb[0].mxu0 %v96
    %v173 = vpop.f32.mrb[0].mxu0
    %v174 = vadd.f32 0.0, %v173
    %v175 = vpop.f32.mrb[0].mxu0
    %176 = vmatprep.mubr.f32.mxu0 0.0
    %177 = vmatmul.mubr.f32.gmra.mrb[0].mxu0 %v104
    %v178 = vpop.f32.mrb[0].mxu0
    %v179 = vadd.f32 0.0, %v178
    %v180 = vpop.f32.mrb[0].mxu0
    %181 = vdwg.mxu0
    %v184 = vcombine.high %v174, %v174
    %v186 = vunpack.c.l.s4 1983009808
    %v187 = vunpack.c.0.s8 %v186
    %v188 = vlaneseq
    %v189 = vshrl.u32 %v188, 7
    %v190 = vsub.s32 %v187, %v189
    %v191 = vrot.slane %v174, %v190
    %v193 = vunpack.c.l.s4 1983009808
    %v194 = vunpack.c.0.s8 %v193
    %v195 = vlaneseq
    %v196 = vshrl.u32 %v195, 7
    %v197 = vsub.s32 %v194, %v196
    %v198 = vrot.slane %v184, %v197
    %v199 = vcombine.high %v191, %v191
    %v200 = vcombine.high %v198, %v198
    %v202 = vunpack.c.l.s4 1983009808
    %v203 = vunpack.c.0.s8 %v202
    %v204 = vlaneseq
    %v205 = vshrl.u32 %v204, 7
    %v206 = vsub.s32 %v203, %v205
    %v207 = vrot.slane %v179, %v206
    %v208 = vcombine.high %v207, %v207
    %v215 = vld [vmem:[%s2] sm:$0x3f]
    %v217 = vcombine.high %v215, %v215
    %v219 = vunpack.c.l.s4 1983009808
    %v220 = vunpack.c.0.s8 %v219
    %v221 = vlaneseq
    %v222 = vshrl.u32 %v221, 7
    %v223 = vsub.s32 %v220, %v222
    %v224 = vrot.slane %v215, %v223
    %v226 = vunpack.c.l.s4 1983009808
    %v227 = vunpack.c.0.s8 %v226
    %v228 = vlaneseq
    %v229 = vshrl.u32 %v228, 7
    %v230 = vsub.s32 %v227, %v229
    %v231 = vrot.slane %v217, %v230
    %v232 = vcombine.high %v224, %v224
    %v236 = vadd.f32 %v191, %v224
    %v237 = vadd.f32 %v199, %v232
    %v238 = vadd.f32 %v198, %v231
    %v239 = vadd.f32 %v200, %v224
    %v240 = vadd.f32 %v207, %v232
    %v241 = vadd.f32 %v208, %v231
    %v248 = vcombine.low %v236, %v237
    %v250 = vunpack.c.l.s4 1983009808
    %v251 = vunpack.c.0.s8 %v250
    %v252 = vlaneseq
    %v253 = vshrl.u32 %v252, 7
    %v254 = vsub.s32 %v251, %v253
    %v255 = vrot.slane %v248, %v254
    %v257 = vunpack.c.l.s4 1983009808
    %v258 = vunpack.c.0.s8 %v257
    %v259 = vlaneseq
    %v260 = vshrl.u32 %v259, 7
    %v261 = vsub.s32 %v258, %v260
    %v262 = vrot.slane %v238, %v261
    %v263 = vcombine.low %v255, %v262
    %v264 = vcombine.low %v239, %v240
    %v266 = vunpack.c.l.s4 1983009808
    %v267 = vunpack.c.0.s8 %v266
    %v268 = vlaneseq
    %v269 = vshrl.u32 %v268, 7
    %v270 = vsub.s32 %v267, %v269
    %v271 = vrot.slane %v264, %v270
    %v273 = vunpack.c.l.s4 1983009808
    %v274 = vunpack.c.0.s8 %v273
    %v275 = vlaneseq
    %v276 = vshrl.u32 %v275, 7
    %v277 = vsub.s32 %v274, %v276
    %v278 = vrot.slane %v241, %v277
    %v279 = vcombine.low %v271, %v278
    %282 = vst [vmem:[%s3] sm:$0x3f] %v263
    %283 = vst [vmem:[%s3 + $0x8] sm:$0x3f] %v279
    // Predicated region
    $region18: #{tpu_custom_call.1} parent=1 // pred_check
      _
    $region19: #{tpu_custom_call.1} parent=1 // pred_check_branch
      %285 = sbr.rel (0) target = $region21
    $region20: #{tpu_custom_call.1} parent=1 // pred_region
      _
    $region21: #{tpu_custom_call.1} parent=1 // pred_fallthru
      _
    // Predicated region
    $region22: #{tpu_custom_call.1} parent=1 // pred_check
      _
    $region23: #{tpu_custom_call.1} parent=1 // pred_check_branch
      %287 = sbr.rel (0) target = $region25
    $region24: #{tpu_custom_call.1} parent=1 // pred_region
      _
    $region25: #{tpu_custom_call.1} parent=1 // pred_fallthru
      _
    %288 = vsyncpa [#allocation3], 1

</llo_original>
